<compile_context>
chip_gen: v6e
topology: v6e:2x2x1
jax: 0.10.0
libtpu: 0.0.40
codegen_flags: <defaults>
</compile_context>

<pallas_src>
import functools

import jax
import jax.numpy as jnp
from jax.experimental import pallas as pl
from jax.experimental.pallas import tpu as pltpu


def _round_up(x, m):
    return ((x + m - 1) // m) * m


def _maybe_pad2d(a, rows, cols):
    pr, pc = rows - a.shape[0], cols - a.shape[1]
    if pr or pc:
        a = jnp.pad(a, ((0, pr), (0, pc)))
    return a


def _vmem_capacity_bytes():
    try:
        info = pltpu.get_tpu_info()
        cap = getattr(info, "vmem_capacity_bytes", None)
        if cap:
            return int(cap)
    except Exception:
        pass
    return 128 << 20  # conservative default (v5e/v6e)


def _min_batch_tiles():
    # v7x has 2 TensorCores per chip; ensure >=2 batch tiles so the "parallel"
    # grid axis actually shards across both cores.
    try:
        kind = jax.devices()[0].device_kind.lower()
        if "v7" in kind:
            return 2
    except Exception:
        pass
    return 1


def _footprint_bytes(tm, tl, k_pad, l_pad, in_bytes, out_bytes, use_scratch):
    b = 0
    b += 2 * tm * k_pad * in_bytes           # x tile (double buffered)
    b += 2 * k_pad * tl * in_bytes           # W_enc column panel
    b += 2 * tl * k_pad * in_bytes           # W_dec row panel
    b += 2 * l_pad * 4                       # b_enc (resident, tiny)
    b += 2 * k_pad * 4                       # b_dec (tiny)
    b += 2 * tm * tl * out_bytes * 2         # pre + lat output tiles
    b += 2 * tm * k_pad * out_bytes          # rec output tile
    if use_scratch:
        b += tm * k_pad * 4                  # f32 accumulator scratch
    return b


def _select_tiles(B, n_inputs, n_latents, tm_req, tl_req,
                  in_bytes, out_bytes, use_scratch, vmem_budget, min_batch_tiles):
    k_pad = _round_up(n_inputs, 128)
    tm = min(max(8, tm_req), _round_up(B, 8))
    if min_batch_tiles > 1 and B > 8:
        tm = min(tm, max(8, _round_up(-(-B // min_batch_tiles), 8)))
    tl = min(max(128, tl_req), _round_up(n_latents, 128))

    def fits(tm_, tl_):
        l_pad_ = _round_up(n_latents, tl_)
        return _footprint_bytes(tm_, tl_, k_pad, l_pad_, in_bytes, out_bytes,
                                use_scratch) <= vmem_budget

    # Shrink the latent panel first (it drives weight-panel VMEM), then tm.
    while not fits(tm, tl) and tl > 128:
        tl = max(128, (tl // 2) // 128 * 128)
    while not fits(tm, tl) and tm > 8:
        tm = max(8, (tm // 2) // 8 * 8)
    return tm, tl, k_pad


def _sae_kernel(x_ref, we_ref, be_ref, wd_ref, bd_ref,
                pre_ref, lat_ref, rec_ref, *scratch, tl):
    l = pl.program_id(1)
    nl = pl.num_programs(1)

    # ---- Encoder tile: pre = x @ W_enc[:, panel l] + b_enc[panel l] --------
    start = pl.multiple_of(l * tl, tl)
    bias_e = be_ref[:, pl.ds(start, tl)].astype(jnp.float32)          # (1, tl)
    pre = jnp.dot(x_ref[...], we_ref[...],
                  preferred_element_type=jnp.float32) + bias_e
    lat = jnp.maximum(pre, 0.0)                                        # ReLU

    pre_ref[...] = pre.astype(pre_ref.dtype)
    lat_ref[...] = lat.astype(lat_ref.dtype)

    # ---- Decoder: accumulate partial products over the latent (K) axis -----
    partial = jnp.dot(lat.astype(wd_ref.dtype), wd_ref[...],
                      preferred_element_type=jnp.float32)

    # If out dtype is f32, the resident rec output block is the accumulator.
    acc_ref = scratch[0] if scratch else rec_ref

    @pl.when(l == 0)
    def _():
        acc_ref[...] = partial.astype(acc_ref.dtype)      # no zero-init pass

    @pl.when(l > 0)
    def _():
        acc_ref[...] = acc_ref[...] + partial.astype(acc_ref.dtype)

    @pl.when(l == nl - 1)
    def _():
        rec_ref[...] = (acc_ref[...].astype(jnp.float32)
                        + bd_ref[...].astype(jnp.float32)).astype(rec_ref.dtype)


def autoencoder_forward(x, w_enc, b_enc, w_dec, b_dec, *,
                        tm=512, tl=1024, out_dtype=None, compute_dtype=None):
    """x: [B, n_inputs]; w_enc: [n_inputs, n_latents]; w_dec: [n_latents, n_inputs];
       b_enc: [n_latents]; b_dec: [n_inputs].
       Returns (latents_pre_act, latents, recons)."""
    B, n_inputs = x.shape
    n_latents = w_enc.shape[1]
    out_dtype = jnp.dtype(out_dtype or x.dtype)
    compute_dtype = jnp.dtype(compute_dtype or x.dtype)

    # Optional bf16 operand path (f32 accumulation inside the kernel).
    if x.dtype != compute_dtype:
        x = x.astype(compute_dtype)
    if w_enc.dtype != compute_dtype:
        w_enc = w_enc.astype(compute_dtype)
    if w_dec.dtype != compute_dtype:
        w_dec = w_dec.astype(compute_dtype)

    in_bytes = compute_dtype.itemsize
    out_bytes = out_dtype.itemsize
    use_scratch = out_dtype != jnp.dtype(jnp.float32)

    vmem_cap = _vmem_capacity_bytes()
    vmem_limit = int(min(vmem_cap - (16 << 20), int(vmem_cap * 0.85)))

    tm_eff, tl_eff, k_pad = _select_tiles(
        B, n_inputs, n_latents, tm, tl,
        in_bytes, out_bytes, use_scratch, vmem_limit, _min_batch_tiles())

    b_pad = _round_up(B, tm_eff)
    l_pad = _round_up(n_latents, tl_eff)

    # Zero padding is exact for this math; it is skipped entirely when shapes
    # are already aligned.  For production, pre-pad the weights once at load.
    x_p = _maybe_pad2d(x, b_pad, k_pad)
    we_p = _maybe_pad2d(w_enc, k_pad, l_pad)
    wd_p = _maybe_pad2d(w_dec, l_pad, k_pad)
    be_p = _maybe_pad2d(b_enc.reshape(1, -1), 1, l_pad)
    bd_p = _maybe_pad2d(b_dec.reshape(1, -1), 1, k_pad)

    nm = b_pad // tm_eff
    nl = l_pad // tl_eff

    out_shapes = (
        jax.ShapeDtypeStruct((b_pad, l_pad), out_dtype),   # latents_pre_act
        jax.ShapeDtypeStruct((b_pad, l_pad), out_dtype),   # latents
        jax.ShapeDtypeStruct((b_pad, k_pad), out_dtype),   # recons
    )

    scratch_shapes = ([] if not use_scratch
                      else [pltpu.VMEM((tm_eff, k_pad), jnp.float32)])

    pre, lat, rec = pl.pallas_call(
        functools.partial(_sae_kernel, tl=tl_eff),
        out_shape=out_shapes,
        grid_spec=pltpu.PrefetchScalarGridSpec(
            num_scalar_prefetch=0,
            grid=(nm, nl),
            in_specs=[
                pl.BlockSpec((tm_eff, k_pad), lambda i, l: (i, 0)),   # x (reused over l)
                pl.BlockSpec((k_pad, tl_eff), lambda i, l: (0, l)),   # W_enc column panel
                pl.BlockSpec((1, l_pad),      lambda i, l: (0, 0)),   # b_enc (resident)
                pl.BlockSpec((tl_eff, k_pad), lambda i, l: (l, 0)),   # W_dec row panel
                pl.BlockSpec((1, k_pad),      lambda i, l: (0, 0)),   # b_dec (resident)
            ],
            out_specs=(
                pl.BlockSpec((tm_eff, tl_eff), lambda i, l: (i, l)),  # pre
                pl.BlockSpec((tm_eff, tl_eff), lambda i, l: (i, l)),  # lat
                pl.BlockSpec((tm_eff, k_pad),  lambda i, l: (i, 0)),  # rec (resident acc)
            ),
            scratch_shapes=scratch_shapes,
        ),
        compiler_params=pltpu.CompilerParams(
            dimension_semantics=("parallel", "arbitrary"),
            vmem_limit_bytes=vmem_limit,
        ),
    )(x_p, we_p, be_p, wd_p, bd_p)

    return (pre[:B, :n_latents], lat[:B, :n_latents], rec[:B, :n_inputs])


def reference_forward(x, w_enc, b_enc, w_dec, b_dec):
    pre = x @ w_enc + b_enc[None, :]
    lat = jnp.maximum(pre, 0.0)
    rec = lat @ w_dec + b_dec[None, :]
    return pre, lat, rec


if __name__ == "__main__":
    # Small but tiling-exercising shapes: batch spans 2 grid tiles (tm=8) and
    # the latent dim spans 3 grid tiles (tl=128), so both the parallel batch
    # axis and the decoder K-accumulation path are actually used.
    batch = 16
    n_inputs = 64
    n_latents = 320

    key = jax.random.PRNGKey(0)
    k_x, k_we, k_be, k_wd, k_bd = jax.random.split(key, 5)

    # Deterministic init mimicking nn.Linear's U(-1/sqrt(fan_in), 1/sqrt(fan_in)).
    x = jax.random.normal(k_x, (batch, n_inputs), dtype=jnp.float32)
    enc_bound = 1.0 / float(jnp.sqrt(jnp.float32(n_inputs)))
    dec_bound = 1.0 / float(jnp.sqrt(jnp.float32(n_latents)))
    w_enc = jax.random.uniform(k_we, (n_inputs, n_latents), jnp.float32,
                               -enc_bound, enc_bound)
    b_enc = jax.random.uniform(k_be, (n_latents,), jnp.float32,
                               -enc_bound, enc_bound)
    w_dec = jax.random.uniform(k_wd, (n_latents, n_inputs), jnp.float32,
                               -dec_bound, dec_bound)
    b_dec = jax.random.uniform(k_bd, (n_inputs,), jnp.float32,
                               -dec_bound, dec_bound)

    pre, lat, rec = autoencoder_forward(x, w_enc, b_enc, w_dec, b_dec,
                                        tm=8, tl=128)
    jax.block_until_ready((pre, lat, rec))

    pre_r, lat_r, rec_r = reference_forward(x, w_enc, b_enc, w_dec, b_dec)
    assert pre.shape == pre_r.shape and lat.shape == lat_r.shape and rec.shape == rec_r.shape
    assert jnp.allclose(pre, pre_r, atol=1e-4, rtol=1e-4), "latents_pre_act mismatch"
    assert jnp.allclose(lat, lat_r, atol=1e-4, rtol=1e-4), "latents mismatch"
    assert jnp.allclose(rec, rec_r, atol=1e-4, rtol=1e-4), "recons mismatch"

    # TODO(synk): the PyTorch module's `tied` / `normalize` flags do not affect
    # its forward() as written, so they are intentionally not modeled here.

    print("KERNEL_OK")
</pallas_src>

<mosaic_0001>
module attributes {stable_mosaic.version = 11 : i64} {
  func.func @_sae_kernel(%arg0: i32, %arg1: i32, %arg2: memref<8x128xf32, #tpu.memory_space<vmem>>, %arg3: memref<128x128xf32, #tpu.memory_space<vmem>>, %arg4: memref<1x384xf32, #tpu.memory_space<vmem>>, %arg5: memref<128x128xf32, #tpu.memory_space<vmem>>, %arg6: memref<1x128xf32, #tpu.memory_space<vmem>>, %arg7: memref<8x128xf32, #tpu.memory_space<vmem>>, %arg8: memref<8x128xf32, #tpu.memory_space<vmem>>, %arg9: memref<8x128xf32, #tpu.memory_space<vmem>>) attributes {dimension_semantics = [#tpu.dimension_semantics<parallel>, #tpu.dimension_semantics<arbitrary>], iteration_bounds = array<i64: 2, 3>, scalar_prefetch = 0 : i64, scratch_operands = 0 : i64, tpu.core_type = #tpu.core_type<tc>, window_params = [{transform_indices = @transform_0, window_bounds = array<i64: 8, 128>}, {transform_indices = @transform_1, window_bounds = array<i64: 128, 128>}, {pipeline_mode = #tpu.pipeline_mode<synchronous>, transform_indices = @transform_2, window_bounds = array<i64: 1, 384>}, {transform_indices = @transform_3, window_bounds = array<i64: 128, 128>}, {pipeline_mode = #tpu.pipeline_mode<synchronous>, transform_indices = @transform_4, window_bounds = array<i64: 1, 128>}, {transform_indices = @transform_5, window_bounds = array<i64: 8, 128>}, {transform_indices = @transform_6, window_bounds = array<i64: 8, 128>}, {transform_indices = @transform_7, window_bounds = array<i64: 8, 128>}]} {
    %c128_i32 = arith.constant 128 : i32
    %0 = arith.muli %arg1, %c128_i32 : i32
    %1 = tpu.assume_multiple %0, 128 : i32
    %c0 = arith.constant 0 : index
    %2 = arith.index_cast %1 : i32 to index
    %3 = vector.load %arg4[%c0, %2] : memref<1x384xf32, #tpu.memory_space<vmem>>, vector<1x128xf32>
    %c0_0 = arith.constant 0 : index
    %c0_1 = arith.constant 0 : index
    %4 = vector.load %arg2[%c0_0, %c0_1] : memref<8x128xf32, #tpu.memory_space<vmem>>, vector<8x128xf32>
    %c0_2 = arith.constant 0 : index
    %c0_3 = arith.constant 0 : index
    %5 = vector.load %arg3[%c0_2, %c0_3] : memref<128x128xf32, #tpu.memory_space<vmem>>, vector<128x128xf32>
    %cst = arith.constant dense<0.000000e+00> : vector<8x128xf32>
    %6 = tpu.matmul %4, %5, %cst {dimension_numbers = #tpu.dot_dimension_numbers<[1], [0], [0], [1], [0, 0, 1, 1], [], []>} : vector<8x128xf32>, vector<128x128xf32>, vector<8x128xf32> -> vector<8x128xf32>
    %7 = vector.broadcast %3 : vector<1x128xf32> to vector<8x128xf32>
    %8 = arith.addf %6, %7 : vector<8x128xf32>
    %cst_4 = arith.constant 0.000000e+00 : f32
    %9 = vector.broadcast %cst_4 : f32 to vector<8x128xf32>
    %10 = arith.maximumf %8, %9 : vector<8x128xf32>
    %c0_5 = arith.constant 0 : index
    %c0_6 = arith.constant 0 : index
    %11 = vector.load %arg7[%c0_5, %c0_6] : memref<8x128xf32, #tpu.memory_space<vmem>>, vector<8x128xf32>
    tpu.vector_store %arg7[%c0_5, %c0_6], %8 {strides = array<i32>} : memref<8x128xf32, #tpu.memory_space<vmem>>, vector<8x128xf32>,
    %c0_7 = arith.constant 0 : index
    %c0_8 = arith.constant 0 : index
    %12 = vector.load %arg8[%c0_7, %c0_8] : memref<8x128xf32, #tpu.memory_space<vmem>>, vector<8x128xf32>
    tpu.vector_store %arg8[%c0_7, %c0_8], %10 {strides = array<i32>} : memref<8x128xf32, #tpu.memory_space<vmem>>, vector<8x128xf32>,
    %c0_9 = arith.constant 0 : index
    %c0_10 = arith.constant 0 : index
    %13 = vector.load %arg5[%c0_9, %c0_10] : memref<128x128xf32, #tpu.memory_space<vmem>>, vector<128x128xf32>
    %cst_11 = arith.constant dense<0.000000e+00> : vector<8x128xf32>
    %14 = tpu.matmul %10, %13, %cst_11 {dimension_numbers = #tpu.dot_dimension_numbers<[1], [0], [0], [1], [0, 0, 1, 1], [], []>} : vector<8x128xf32>, vector<128x128xf32>, vector<8x128xf32> -> vector<8x128xf32>
    %c0_i32 = arith.constant 0 : i32
    %15 = arith.cmpi eq, %arg1, %c0_i32 : i32
    %16 = arith.extui %15 : i1 to i32
    %c0_i32_12 = arith.constant 0 : i32
    %17 = arith.cmpi ne, %16, %c0_i32_12 : i32
    scf.if %17 {
      %c0_16 = arith.constant 0 : index
      %c0_17 = arith.constant 0 : index
      %24 = vector.load %arg9[%c0_16, %c0_17] : memref<8x128xf32, #tpu.memory_space<vmem>>, vector<8x128xf32>
      tpu.vector_store %arg9[%c0_16, %c0_17], %14 {strides = array<i32>} : memref<8x128xf32, #tpu.memory_space<vmem>>, vector<8x128xf32>,
    } else {
    }
    %c0_i32_13 = arith.constant 0 : i32
    %18 = arith.cmpi sgt, %arg1, %c0_i32_13 : i32
    %19 = arith.extui %18 : i1 to i32
    %c0_i32_14 = arith.constant 0 : i32
    %20 = arith.cmpi ne, %19, %c0_i32_14 : i32
    scf.if %20 {
      %c0_16 = arith.constant 0 : index
      %c0_17 = arith.constant 0 : index
      %24 = vector.load %arg9[%c0_16, %c0_17] : memref<8x128xf32, #tpu.memory_space<vmem>>, vector<8x128xf32>
      %25 = arith.addf %24, %14 : vector<8x128xf32>
      %c0_18 = arith.constant 0 : index
      %c0_19 = arith.constant 0 : index
      %26 = vector.load %arg9[%c0_18, %c0_19] : memref<8x128xf32, #tpu.memory_space<vmem>>, vector<8x128xf32>
      tpu.vector_store %arg9[%c0_18, %c0_19], %25 {strides = array<i32>} : memref<8x128xf32, #tpu.memory_space<vmem>>, vector<8x128xf32>,
    } else {
    }
    %c2_i32 = arith.constant 2 : i32
    %21 = arith.cmpi eq, %arg1, %c2_i32 : i32
    %22 = arith.extui %21 : i1 to i32
    %c0_i32_15 = arith.constant 0 : i32
    %23 = arith.cmpi ne, %22, %c0_i32_15 : i32
    scf.if %23 {
      %c0_16 = arith.constant 0 : index
      %c0_17 = arith.constant 0 : index
      %24 = vector.load %arg9[%c0_16, %c0_17] : memref<8x128xf32, #tpu.memory_space<vmem>>, vector<8x128xf32>
      %c0_18 = arith.constant 0 : index
      %c0_19 = arith.constant 0 : index
      %25 = vector.load %arg6[%c0_18, %c0_19] : memref<1x128xf32, #tpu.memory_space<vmem>>, vector<1x128xf32>
      %26 = vector.broadcast %25 : vector<1x128xf32> to vector<8x128xf32>
      %27 = arith.addf %24, %26 : vector<8x128xf32>
      %c0_20 = arith.constant 0 : index
      %c0_21 = arith.constant 0 : index
      %28 = vector.load %arg9[%c0_20, %c0_21] : memref<8x128xf32, #tpu.memory_space<vmem>>, vector<8x128xf32>
      tpu.vector_store %arg9[%c0_20, %c0_21], %27 {strides = array<i32>} : memref<8x128xf32, #tpu.memory_space<vmem>>, vector<8x128xf32>,
    } else {
    }
    return
  }
  func.func @transform_0(%arg0: i32, %arg1: i32) -> (i32, i32) {
    %c0_i32 = arith.constant 0 : i32
    %c0_i32_0 = arith.constant 0 : i32
    return %arg0, %c0_i32 : i32, i32
  }
  func.func @transform_1(%arg0: i32, %arg1: i32) -> (i32, i32) {
    %c0_i32 = arith.constant 0 : i32
    %c0_i32_0 = arith.constant 0 : i32
    return %c0_i32, %arg1 : i32, i32
  }
  func.func @transform_2(%arg0: i32, %arg1: i32) -> (i32, i32) {
    %c0_i32 = arith.constant 0 : i32
    %c0_i32_0 = arith.constant 0 : i32
    %c0_i32_1 = arith.constant 0 : i32
    return %c0_i32, %c0_i32_0 : i32, i32
  }
  func.func @transform_3(%arg0: i32, %arg1: i32) -> (i32, i32) {
    %c0_i32 = arith.constant 0 : i32
    %c0_i32_0 = arith.constant 0 : i32
    return %arg1, %c0_i32 : i32, i32
  }
  func.func @transform_4(%arg0: i32, %arg1: i32) -> (i32, i32) {
    %c0_i32 = arith.constant 0 : i32
    %c0_i32_0 = arith.constant 0 : i32
    %c0_i32_1 = arith.constant 0 : i32
    return %c0_i32, %c0_i32_0 : i32, i32
  }
  func.func @transform_5(%arg0: i32, %arg1: i32) -> (i32, i32) {
    %c0_i32 = arith.constant 0 : i32
    return %arg0, %arg1 : i32, i32
  }
  func.func @transform_6(%arg0: i32, %arg1: i32) -> (i32, i32) {
    %c0_i32 = arith.constant 0 : i32
    return %arg0, %arg1 : i32, i32
  }
  func.func @transform_7(%arg0: i32, %arg1: i32) -> (i32, i32) {
    %c0_i32 = arith.constant 0 : i32
    %c0_i32_0 = arith.constant 0 : i32
    return %arg0, %c0_i32 : i32, i32
  }
}

</mosaic_0001>

<llo_original>
// kernel: tpu_custom_call.1
$region0: #{tpu_custom_call.1}
  #allocation0 [shape = 'u32[]', space=smem, size = 0x4, offset = 0x4, fixed_abs, tag = 'smem constant byte address 0x4 - core index']
  #allocation1 [shape = 'u32[144,128]{1,0:T(1,128)}', space=vmem, size = 0x12000, scoped, tag = 'internal scratch']
  %s0 = inlined_call_operand.hbm [shape: f32[16,128], index: 0, kind: input, shape index: {}]
  %s1 = inlined_call_operand.hbm [shape: f32[128,384], index: 1, kind: input, shape index: {}]
  %s2 = inlined_call_operand.vmem [shape: f32[1,384], index: 2, kind: input, shape index: {}]
  %s3 = inlined_call_operand.hbm [shape: f32[384,128], index: 3, kind: input, shape index: {}]
  %s4 = inlined_call_operand.vmem [shape: f32[1,128], index: 4, kind: input, shape index: {}]
  %s5 = inlined_call_operand.hbm [shape: f32[16,384], index: 5, kind: output, shape index: {0}]
  %s6 = inlined_call_operand.hbm [shape: f32[16,384], index: 6, kind: output, shape index: {1}]
  %s7 = inlined_call_operand.hbm [shape: f32[16,128], index: 7, kind: output, shape index: {2}]
  %8 = xla_tuple %s5, %s6, %s7
  %s9 = sld [smem:[#allocation0]]
  $region93: #{tpu_custom_call.1} parent=0
    _
  %s11 = ssub.s32 1, %s9
  %s12 = scalar_select 0, %s11, %s9
  $region1: #{tpu_custom_call.1} parent=0
    #allocation2 [shape = 'u8[8192]{0}', space=vmem, size = 0x2000, scoped, tag = 'input window, operand 0']
    #allocation3 [shape = 's32[2]{0}', space=sflag, size = 0x8, scoped, tag = 'scoped memory for tpu_custom_call.1']
    #allocation4 [shape = 's32[2]{0}', space=sflag, size = 0x8, scoped, tag = 'scoped memory for tpu_custom_call.1']
    #allocation5 [shape = 'u8[131072]{0}', space=vmem, size = 0x20000, scoped, tag = 'input window, operand 1']
    #allocation6 [shape = 's32[2]{0}', space=sflag, size = 0x8, scoped, tag = 'scoped memory for tpu_custom_call.1']
    #allocation7 [shape = 'u8[131072]{0}', space=vmem, size = 0x20000, scoped, tag = 'input window, operand 3']
    #allocation8 [shape = 'u8[8192]{0}', space=vmem, size = 0x2000, scoped, tag = 'output window, operand 0']
    #allocation9 [shape = 'u8[8192]{0}', space=vmem, size = 0x2000, scoped, tag = 'output window, operand 1']
    #allocation10 [shape = 's32[2]{0}', space=sflag, size = 0x8, scoped, tag = 'scoped memory for tpu_custom_call.1']
    #allocation11 [shape = 'u8[8192]{0}', space=vmem, size = 0x2000, scoped, tag = 'output window, operand 2']
    %13 = vsyncpa [#allocation3], 0
    %s14 = scalar_lea.sflag [#allocation3], 1
    %15 = vsyncpa %s14, 0
    %16 = vsyncpa [#allocation6], 0
    %s17 = scalar_lea.sflag [#allocation6], 1
    %18 = vsyncpa %s17, 0
    %19 = vsyncpa [#allocation4], 0
    %s20 = scalar_lea.sflag [#allocation4], 1
    %21 = vsyncpa %s20, 0
    %22 = vsyncpa [#allocation10], 0
    %s23 = scalar_lea.sflag [#allocation10], 1
    %24 = vsyncpa %s23, 0
    loop: start=0, step=1, limit=8
    $region2: #{tpu_custom_call.1} parent=1 // loop_pre_header
      _
    $region3: #{tpu_custom_call.1} parent=1 // loop_header
      %s26 = sphi 0, %s30
      %p27 = scmp.ge.s32.totalorder %s26, 8
      %s33 = sphi 0, %s45
      %s34 = sphi 0, %s41
      %s35 = sphi 0, %s33
      %s36 = sphi 0, %s34
      %s37 = sphi 0, %s35
      %s38 = sphi 0, %s36
      %s48 = sphi 0, %s50
      %s51 = sphi 0, %s48
      %s52 = sphi 0, %s51
      %s68 = sphi 0, %s52
      %s74 = sphi 0, %s76
      %s77 = sphi 0, %s74
      %s78 = sphi 0, %s77
      %s94 = sphi 0, %s78
      %s98 = sphi 0, %s98
      %s100 = sphi 0, %s98
      %s101 = sphi 0, %s100
      %s115 = sphi 0, %s101
      %s121 = sphi 0, %s123
      %s124 = sphi 0, %s121
      %s125 = sphi 0, %s124
      %s141 = sphi 0, %s125
      %s145 = sphi 0, %s145
      %s147 = sphi 0, %s145
      %s148 = sphi 0, %s147
      %s162 = sphi 0, %s148
      %s170 = sphi 0, %s172
      %s173 = sphi 0, %s170
      %s174 = sphi 0, %s173
      %s190 = sphi 0, %s174
      %s198 = sphi 0, %s200
      %s201 = sphi 0, %s198
      %s202 = sphi 0, %s201
      %s218 = sphi 0, %s202
      %s224 = sphi 0, %s226
      %s227 = sphi 0, %s224
      %s228 = sphi 0, %s227
      %s244 = sphi 0, %s228
    $region4: #{tpu_custom_call.1} parent=1 // loop_header_branch
      %29 = sbr.rel (%p27) target = $region8
    $region5: #{tpu_custom_call.1} parent=1 // loop_body
      %s31 = ssub.s32 %s26, 1
      %s32 = ssub.s32 %s26, 2
      %s39 = sadd.s32 1, %s34
      %p40 = scmp.ge.s32.totalorder %s39, 3
      %s41 = scalar_select %p40, 0, %s39
      %s42 = sadd.s32 1, %s33
      %s43 = scalar_select %p40, %s42, %s33
      %p44 = scmp.ge.s32.totalorder %s43, 2
      %s45 = scalar_select %p44, 0, %s43
      %s46 = ssub.s32 %s33, %s45
      %p47 = scmp.eq.s32.totalorder %s46, 0
      %s49 = sadd.s32 %s48, 1
      %s50 = scalar_select %p47, %s48, %s49
      %p53 = pneg %p47
      %p54 = scmp.eq.s32.totalorder %s26, 5
      %p55 = por %p53, %p54
      %p56 = scmp.ne.s32.totalorder %s48, %s51
      %p57 = scmp.eq.s32.totalorder %s26, 0
      %p58 = por %p56, %p57
      %p59 = scmp.ne.s32.totalorder %s48, %s51
      %p60 = scmp.eq.s32.totalorder %s31, 5
      %p61 = por %p59, %p60
      %p62 = scmp.ne.s32.totalorder %s51, %s52
      %p63 = scmp.eq.s32.totalorder %s31, 0
      %p64 = por %p62, %p63
      %p65 = scmp.ne.s32.totalorder %s51, %s52
      %p66 = scmp.eq.s32.totalorder %s32, 5
      %p67 = por %p65, %p66
      %p69 = scmp.ne.s32.totalorder %s52, %s68
      %p70 = scmp.eq.s32.totalorder %s32, 0
      %p71 = por %p69, %p70
      %s72 = ssub.s32 %s34, %s41
      %p73 = scmp.eq.s32.totalorder %s72, 0
      %s75 = sadd.s32 %s74, 1
      %s76 = scalar_select %p73, %s74, %s75
      %p79 = pneg %p73
      %p80 = scmp.eq.s32.totalorder %s26, 5
      %p81 = por %p79, %p80
      %p82 = scmp.ne.s32.totalorder %s74, %s77
      %p83 = scmp.eq.s32.totalorder %s26, 0
      %p84 = por %p82, %p83
      %p85 = scmp.ne.s32.totalorder %s74, %s77
      %p86 = scmp.eq.s32.totalorder %s31, 5
      %p87 = por %p85, %p86
      %p88 = scmp.ne.s32.totalorder %s77, %s78
      %p89 = scmp.eq.s32.totalorder %s31, 0
      %p90 = por %p88, %p89
      %p91 = scmp.ne.s32.totalorder %s77, %s78
      %p92 = scmp.eq.s32.totalorder %s32, 5
      %p93 = por %p91, %p92
      %p95 = scmp.ne.s32.totalorder %s78, %s94
      %p96 = scmp.eq.s32.totalorder %s32, 0
      %p97 = por %p95, %p96
      %s99 = sadd.s32 %s98, 1
      %p102 = scmp.eq.s32.totalorder %s26, 5
      %p103 = scmp.ne.s32.totalorder %s98, %s100
      %p104 = scmp.eq.s32.totalorder %s26, 0
      %p105 = por %p103, %p104
      %p106 = scmp.ne.s32.totalorder %s98, %s100
      %p107 = scmp.eq.s32.totalorder %s31, 5
      %p108 = por %p106, %p107
      %p109 = scmp.ne.s32.totalorder %s100, %s101
      %p110 = scmp.eq.s32.totalorder %s31, 0
      %p111 = por %p109, %p110
      %p112 = scmp.ne.s32.totalorder %s100, %s101
      %p113 = scmp.eq.s32.totalorder %s32, 5
      %p114 = por %p112, %p113
      %p116 = scmp.ne.s32.totalorder %s101, %s115
      %p117 = scmp.eq.s32.totalorder %s32, 0
      %p118 = por %p116, %p117
      %s119 = ssub.s32 %s34, %s41
      %p120 = scmp.eq.s32.totalorder %s119, 0
      %s122 = sadd.s32 %s121, 1
      %s123 = scalar_select %p120, %s121, %s122
      %p126 = pneg %p120
      %p127 = scmp.eq.s32.totalorder %s26, 5
      %p128 = por %p126, %p127
      %p129 = scmp.ne.s32.totalorder %s121, %s124
      %p130 = scmp.eq.s32.totalorder %s26, 0
      %p131 = por %p129, %p130
      %p132 = scmp.ne.s32.totalorder %s121, %s124
      %p133 = scmp.eq.s32.totalorder %s31, 5
      %p134 = por %p132, %p133
      %p135 = scmp.ne.s32.totalorder %s124, %s125
      %p136 = scmp.eq.s32.totalorder %s31, 0
      %p137 = por %p135, %p136
      %p138 = scmp.ne.s32.totalorder %s124, %s125
      %p139 = scmp.eq.s32.totalorder %s32, 5
      %p140 = por %p138, %p139
      %p142 = scmp.ne.s32.totalorder %s125, %s141
      %p143 = scmp.eq.s32.totalorder %s32, 0
      %p144 = por %p142, %p143
      %s146 = sadd.s32 %s145, 1
      %p149 = scmp.eq.s32.totalorder %s26, 5
      %p150 = scmp.ne.s32.totalorder %s145, %s147
      %p151 = scmp.eq.s32.totalorder %s26, 0
      %p152 = por %p150, %p151
      %p153 = scmp.ne.s32.totalorder %s145, %s147
      %p154 = scmp.eq.s32.totalorder %s31, 5
      %p155 = por %p153, %p154
      %p156 = scmp.ne.s32.totalorder %s147, %s148
      %p157 = scmp.eq.s32.totalorder %s31, 0
      %p158 = por %p156, %p157
      %p159 = scmp.ne.s32.totalorder %s147, %s148
      %p160 = scmp.eq.s32.totalorder %s32, 5
      %p161 = por %p159, %p160
      %p163 = scmp.ne.s32.totalorder %s148, %s162
      %p164 = scmp.eq.s32.totalorder %s32, 0
      %p165 = por %p163, %p164
      %s166 = ssub.s32 %s33, %s45
      %s167 = ssub.s32 %s34, %s41
      %s168 = sor.u32 %s166, %s167
      %p169 = scmp.eq.s32.totalorder %s168, 0
      %s171 = sadd.s32 %s170, 1
      %s172 = scalar_select %p169, %s170, %s171
      %p175 = pneg %p169
      %p176 = scmp.eq.s32.totalorder %s26, 5
      %p177 = por %p175, %p176
      %p178 = scmp.ne.s32.totalorder %s170, %s173
      %p179 = scmp.eq.s32.totalorder %s26, 0
      %p180 = por %p178, %p179
      %p181 = scmp.ne.s32.totalorder %s170, %s173
      %p182 = scmp.eq.s32.totalorder %s31, 5
      %p183 = por %p181, %p182
      %p184 = scmp.ne.s32.totalorder %s173, %s174
      %p185 = scmp.eq.s32.totalorder %s31, 0
      %p186 = por %p184, %p185
      %p187 = scmp.ne.s32.totalorder %s173, %s174
      %p188 = scmp.eq.s32.totalorder %s32, 5
      %p189 = por %p187, %p188
      %p191 = scmp.ne.s32.totalorder %s174, %s190
      %p192 = scmp.eq.s32.totalorder %s32, 0
      %p193 = por %p191, %p192
      %s194 = ssub.s32 %s33, %s45
      %s195 = ssub.s32 %s34, %s41
      %s196 = sor.u32 %s194, %s195
      %p197 = scmp.eq.s32.totalorder %s196, 0
      %s199 = sadd.s32 %s198, 1
      %s200 = scalar_select %p197, %s198, %s199
      %p203 = pneg %p197
      %p204 = scmp.eq.s32.totalorder %s26, 5
      %p205 = por %p203, %p204
      %p206 = scmp.ne.s32.totalorder %s198, %s201
      %p207 = scmp.eq.s32.totalorder %s26, 0
      %p208 = por %p206, %p207
      %p209 = scmp.ne.s32.totalorder %s198, %s201
      %p210 = scmp.eq.s32.totalorder %s31, 5
      %p211 = por %p209, %p210
      %p212 = scmp.ne.s32.totalorder %s201, %s202
      %p213 = scmp.eq.s32.totalorder %s31, 0
      %p214 = por %p212, %p213
      %p215 = scmp.ne.s32.totalorder %s201, %s202
      %p216 = scmp.eq.s32.totalorder %s32, 5
      %p217 = por %p215, %p216
      %p219 = scmp.ne.s32.totalorder %s202, %s218
      %p220 = scmp.eq.s32.totalorder %s32, 0
      %p221 = por %p219, %p220
      %s222 = ssub.s32 %s33, %s45
      %p223 = scmp.eq.s32.totalorder %s222, 0
      %s225 = sadd.s32 %s224, 1
      %s226 = scalar_select %p223, %s224, %s225
      %p229 = pneg %p223
      %p230 = scmp.eq.s32.totalorder %s26, 5
      %p231 = por %p229, %p230
      %p232 = scmp.ne.s32.totalorder %s224, %s227
      %p233 = scmp.eq.s32.totalorder %s26, 0
      %p234 = por %p232, %p233
      %p235 = scmp.ne.s32.totalorder %s224, %s227
      %p236 = scmp.eq.s32.totalorder %s31, 5
      %p237 = por %p235, %p236
      %p238 = scmp.ne.s32.totalorder %s227, %s228
      %p239 = scmp.eq.s32.totalorder %s31, 0
      %p240 = por %p238, %p239
      %p241 = scmp.ne.s32.totalorder %s227, %s228
      %p242 = scmp.eq.s32.totalorder %s32, 5
      %p243 = por %p241, %p242
      %p245 = scmp.ne.s32.totalorder %s228, %s244
      %p246 = scmp.eq.s32.totalorder %s32, 0
      %p247 = por %p245, %p246
      %p248 = scmp.le.s32.totalorder 1, %s26
      %p249 = scmp.lt.s32.totalorder %s26, 7
      %p250 = pnand %p248, %p249
      %p251 = pneg %p250
      // Predicated region
      $region9: #{tpu_custom_call.1} parent=5 // pred_check
        _
      $region10: #{tpu_custom_call.1} parent=5 // pred_check_branch
        %253 = sbr.rel (%p250) target = $region12
      $region11: #{tpu_custom_call.1} parent=5 // pred_region
        %s254 = ssub.s32 %s26, 1
        // Predicated region
        $region13: #{tpu_custom_call.1} parent=11 // pred_check
          %p255 = pneg %p111
        $region14: #{tpu_custom_call.1} parent=11 // pred_check_branch
          %257 = sbr.rel (%p255) target = $region16
        $region15: #{tpu_custom_call.1} parent=11 // pred_region
          _
        $region16: #{tpu_custom_call.1} parent=11 // pred_fallthru
          _
        // Predicated region
        $region17: #{tpu_custom_call.1} parent=11 // pred_check
          %p258 = pneg %p158
        $region18: #{tpu_custom_call.1} parent=11 // pred_check_branch
          %260 = sbr.rel (%p258) target = $region20
        $region19: #{tpu_custom_call.1} parent=11 // pred_region
          _
        $region20: #{tpu_custom_call.1} parent=11 // pred_fallthru
          _
      $region12: #{tpu_custom_call.1} parent=5 // pred_fallthru
        _
      %p261 = scmp.lt.s32.totalorder %s26, 6
      // Predicated region
      $region21: #{tpu_custom_call.1} parent=5 // pred_check
        %p262 = pneg %p261
      $region22: #{tpu_custom_call.1} parent=5 // pred_check_branch
        %264 = sbr.rel (%p262) target = $region24
      $region23: #{tpu_custom_call.1} parent=5 // pred_region
        // Predicated region
        $region25: #{tpu_custom_call.1} parent=23 // pred_check
          %p265 = pneg %p58
        $region26: #{tpu_custom_call.1} parent=23 // pred_check_branch
          %267 = sbr.rel (%p265) target = $region28
        $region27: #{tpu_custom_call.1} parent=23 // pred_region
          %s268 = sand.u32 %s48, 1
          %s269 = scalar_lea.sflag [#allocation3], %s268
          %s270 = sand.u32 %s48, 1
          %s271 = smul.addr %s270, 8
          %s272 = scalar_lea.vmem [#allocation2], %s271
          %s274 = ssub.s32 128, 128
          %275 = vsyncadd %s269, %s274
          %s276 = smul.addr %s33, 128
          %s277 = scalar_lea.hbm %s0, %s276
          %s279 = sshll.u32 %s272, 4
          %s280 = int_to_ptr.vmem [resolvable:$true] %s279
          %282 = dma.hbm_to_vmem [thread:$0]  %s277, 128, %s280, %s269
        $region28: #{tpu_custom_call.1} parent=23 // pred_fallthru
          _
        // Predicated region
        $region29: #{tpu_custom_call.1} parent=23 // pred_check
          %p283 = pneg %p84
        $region30: #{tpu_custom_call.1} parent=23 // pred_check_branch
          %285 = sbr.rel (%p283) target = $region32
        $region31: #{tpu_custom_call.1} parent=23 // pred_region
          %s286 = sand.u32 %s26, 1
          %s287 = scalar_lea.sflag [#allocation6], %s286
          %s288 = sand.u32 %s74, 1
          %s289 = smul.addr %s288, 128
          %s290 = scalar_lea.vmem [#allocation5], %s289
          %s292 = ssub.s32 2048, 2048
          %293 = vsyncadd %s287, %s292
          %s294 = smul.addr %s34, 128
          %s295 = scalar_lea.hbm %s1, %s294
          %s296 = sshll.u32 %s290, 4
          %s297 = int_to_ptr.vmem [resolvable:$true] %s296
          %302 = dma.hbm_to_vmem [thread:$0]  %s295, 2048, %s297, %s287, 384, 128, 8
        $region32: #{tpu_custom_call.1} parent=23 // pred_fallthru
          _
        // Predicated region
        $region33: #{tpu_custom_call.1} parent=23 // pred_check
          %p303 = pneg %p131
        $region34: #{tpu_custom_call.1} parent=23 // pred_check_branch
          %305 = sbr.rel (%p303) target = $region36
        $region35: #{tpu_custom_call.1} parent=23 // pred_region
          %s306 = sand.u32 %s26, 1
          %s307 = scalar_lea.sflag [#allocation6], %s306
          %s308 = sand.u32 %s121, 1
          %s309 = smul.addr %s308, 128
          %s310 = scalar_lea.vmem [#allocation7], %s309
          %s311 = smul.u32 16, %s34
          %s313 = ssub.s32 2048, 2048
          %314 = vsyncadd %s307, %s313
          %s315 = smul.addr %s311, 128
          %s316 = scalar_lea.hbm %s3, %s315
          %s317 = sshll.u32 %s310, 4
          %s318 = int_to_ptr.vmem [resolvable:$true] %s317
          %323 = dma.hbm_to_vmem [thread:$0]  %s316, 2048, %s318, %s307, 128, 128, 8
        $region36: #{tpu_custom_call.1} parent=23 // pred_fallthru
          _
      $region24: #{tpu_custom_call.1} parent=5 // pred_fallthru
        _
      %p324 = scmp.le.s32.totalorder 1, %s26
      %p325 = scmp.lt.s32.totalorder %s26, 7
      %p326 = pnand %p324, %p325
      %p327 = pneg %p326
      // Predicated region
      $region37: #{tpu_custom_call.1} parent=5 // pred_check
        _
      $region38: #{tpu_custom_call.1} parent=5 // pred_check_branch
        %329 = sbr.rel (%p326) target = $region40
      $region39: #{tpu_custom_call.1} parent=5 // pred_region
        %s330 = ssub.s32 %s26, 1
        %s331 = sand.u32 %s51, 1
        %s332 = scalar_lea.sflag [#allocation3], %s331
        %s333 = sand.u32 %s51, 1
        %s334 = smul.addr %s333, 8
        %s335 = scalar_lea.vmem [#allocation2], %s334
        // Predicated region
        $region41: #{tpu_custom_call.1} parent=39 // pred_check
          %p336 = pneg %p64
        $region42: #{tpu_custom_call.1} parent=39 // pred_check_branch
          %338 = sbr.rel (%p336) target = $region44
        $region43: #{tpu_custom_call.1} parent=39 // pred_region
          %339 = dma.done %s332, 128
        $region44: #{tpu_custom_call.1} parent=39 // pred_fallthru
          _
        %s340 = sand.u32 %s31, 1
        %s341 = scalar_lea.sflag [#allocation6], %s340
        %s342 = sand.u32 %s77, 1
        %s343 = smul.addr %s342, 128
        %s344 = scalar_lea.vmem [#allocation5], %s343
        // Predicated region
        $region45: #{tpu_custom_call.1} parent=39 // pred_check
          %p345 = pneg %p90
        $region46: #{tpu_custom_call.1} parent=39 // pred_check_branch
          %347 = sbr.rel (%p345) target = $region48
        $region47: #{tpu_custom_call.1} parent=39 // pred_region
          %348 = dma.done %s341, 2048
        $region48: #{tpu_custom_call.1} parent=39 // pred_fallthru
          _
        %s349 = sand.u32 %s31, 1
        %s350 = scalar_lea.sflag [#allocation6], %s349
        %s351 = sand.u32 %s124, 1
        %s352 = smul.addr %s351, 128
        %s353 = scalar_lea.vmem [#allocation7], %s352
        // Predicated region
        $region49: #{tpu_custom_call.1} parent=39 // pred_check
          %p354 = pneg %p137
        $region50: #{tpu_custom_call.1} parent=39 // pred_check_branch
          %356 = sbr.rel (%p354) target = $region52
        $region51: #{tpu_custom_call.1} parent=39 // pred_region
          %357 = dma.done %s350, 2048
        $region52: #{tpu_custom_call.1} parent=39 // pred_fallthru
          _
        %s358 = sand.u32 %s51, 1
        %s359 = scalar_lea.sflag [#allocation3], %s358
        %s360 = sand.u32 %s51, 1
        %s361 = smul.addr %s360, 8
        %s362 = scalar_lea.vmem [#allocation2], %s361
        %p363 = pneg %p64
        %p364 = pneg %p61
        %s365 = sand.u32 %s31, 1
        %s366 = scalar_lea.sflag [#allocation6], %s365
        %s367 = sand.u32 %s77, 1
        %s368 = smul.addr %s367, 128
        %s369 = scalar_lea.vmem [#allocation5], %s368
        %p370 = pneg %p90
        %p371 = pneg %p87
        %p372 = pneg %p111
        %p373 = pneg %p108
        %s374 = sand.u32 %s31, 1
        %s375 = scalar_lea.sflag [#allocation6], %s374
        %s376 = sand.u32 %s124, 1
        %s377 = smul.addr %s376, 128
        %s378 = scalar_lea.vmem [#allocation7], %s377
        %p379 = pneg %p137
        %p380 = pneg %p134
        %p381 = pneg %p158
        %p382 = pneg %p155
        %p383 = pneg %p186
        %p384 = pneg %p183
        %s385 = sand.u32 %s173, 1
        %s386 = scalar_lea.sflag [#allocation4], %s385
        %s387 = sand.u32 %s173, 1
        %s388 = smul.addr %s387, 8
        %s389 = scalar_lea.vmem [#allocation8], %s388
        %p390 = pneg %p214
        %p391 = pneg %p211
        %s392 = sand.u32 %s31, 1
        %s393 = scalar_lea.sflag [#allocation10], %s392
        %s394 = sand.u32 %s201, 1
        %s395 = smul.addr %s394, 8
        %s396 = scalar_lea.vmem [#allocation9], %s395
        %p397 = pneg %p240
        %p398 = pneg %p237
        %s399 = sand.u32 %s31, 1
        %s400 = scalar_lea.sflag [#allocation10], %s399
        %s401 = sand.u32 %s227, 1
        %s402 = smul.addr %s401, 8
        %s403 = scalar_lea.vmem [#allocation11], %s402
        %s404 = smul.u32 16, %s36
        %s405 = smul.u32 %s36, 128
        %s406 = sshra.s32 %s405, 7
        %s407 = sand.u32 %s405, 127
        %s408 = scalar_lea.vmem %s2, %s406
        %v409 = vld [vmem:[%s408] sm:$0x1]
        %v410 = vld [vmem:[%s335] sm:$0xff]
        %v411 = vld [vmem:[%s344] sm:$0xff]
        %v412 = vld [vmem:[%s344 + $0x8] sm:$0xff]
        %v413 = vld [vmem:[%s344 + $0x10] sm:$0xff]
        %v414 = vld [vmem:[%s344 + $0x18] sm:$0xff]
        %v415 = vld [vmem:[%s344 + $0x20] sm:$0xff]
        %v416 = vld [vmem:[%s344 + $0x28] sm:$0xff]
        %v417 = vld [vmem:[%s344 + $0x30] sm:$0xff]
        %v418 = vld [vmem:[%s344 + $0x38] sm:$0xff]
        %v419 = vld [vmem:[%s344 + $0x40] sm:$0xff]
        %v420 = vld [vmem:[%s344 + $0x48] sm:$0xff]
        %v421 = vld [vmem:[%s344 + $0x50] sm:$0xff]
        %v422 = vld [vmem:[%s344 + $0x58] sm:$0xff]
        %v423 = vld [vmem:[%s344 + $0x60] sm:$0xff]
        %v424 = vld [vmem:[%s344 + $0x68] sm:$0xff]
        %v425 = vld [vmem:[%s344 + $0x70] sm:$0xff]
        %v426 = vld [vmem:[%s344 + $0x78] sm:$0xff]
        %v428 = vlaneseq
        %v429 = vshrl.u32 %v428, 7
        %v430 = vsub.s32 0, %v429
        %v431 = vrot.slane %v409, %v430
        %433 = vmatprep.subr.mxu0 0.0
        %434 = vmatpush1.msra.mxu0 %v426
        %435 = vmatprep.subr.mxu0 0.0
        %436 = vmatpush1.msra.mxu0 %v425
        %437 = vmatprep.subr.mxu0 0.0
        %438 = vmatpush1.msra.mxu0 %v424
        %439 = vmatprep.subr.mxu0 0.0
        %440 = vmatpush1.msra.mxu0 %v423
        %441 = vmatprep.subr.mxu0 0.0
        %442 = vmatpush1.msra.mxu0 %v422
        %443 = vmatprep.subr.mxu0 0.0
        %444 = vmatpush1.msra.mxu0 %v421
        %445 = vmatprep.subr.mxu0 0.0
        %446 = vmatpush1.msra.mxu0 %v420
        %447 = vmatprep.subr.mxu0 0.0
        %448 = vmatpush1.msra.mxu0 %v419
        %449 = vmatprep.subr.mxu0 0.0
        %450 = vmatpush1.msra.mxu0 %v418
        %451 = vmatprep.subr.mxu0 0.0
        %452 = vmatpush1.msra.mxu0 %v417
        %453 = vmatprep.subr.mxu0 0.0
        %454 = vmatpush1.msra.mxu0 %v416
        %455 = vmatprep.subr.mxu0 0.0
        %456 = vmatpush1.msra.mxu0 %v415
        %457 = vmatprep.subr.mxu0 0.0
        %458 = vmatpush1.msra.mxu0 %v414
        %459 = vmatprep.subr.mxu0 0.0
        %460 = vmatpush1.msra.mxu0 %v413
        %461 = vmatprep.subr.mxu0 0.0
        %462 = vmatpush1.msra.mxu0 %v412
        %463 = vmatprep.subr.mxu0 0.0
        %464 = vmatpush1.msra.mxu0 %v411
        %465 = vmatprep.subr.mxu0 0.0
        %466 = vmatpush2.msra.mxu0 0.0
        %467 = vmatprep.subr.mxu0 0.0
        %468 = vmatpush2.msra.mxu0 0.0
        %469 = vmatprep.subr.mxu0 0.0
        %470 = vmatpush2.msra.mxu0 0.0
        %471 = vmatprep.subr.mxu0 0.0
        %472 = vmatpush2.msra.mxu0 0.0
        %473 = vmatprep.subr.mxu0 0.0
        %474 = vmatpush2.msra.mxu0 0.0
        %475 = vmatprep.subr.mxu0 0.0
        %476 = vmatpush2.msra.mxu0 0.0
        %477 = vmatprep.subr.mxu0 0.0
        %478 = vmatpush2.msra.mxu0 0.0
        %479 = vmatprep.subr.mxu0 0.0
        %480 = vmatpush2.msra.mxu0 0.0
        %481 = vmatprep.subr.mxu0 0.0
        %482 = vmatpush2.msra.mxu0 0.0
        %483 = vmatprep.subr.mxu0 0.0
        %484 = vmatpush2.msra.mxu0 0.0
        %485 = vmatprep.subr.mxu0 0.0
        %486 = vmatpush2.msra.mxu0 0.0
        %487 = vmatprep.subr.mxu0 0.0
        %488 = vmatpush2.msra.mxu0 0.0
        %489 = vmatprep.subr.mxu0 0.0
        %490 = vmatpush2.msra.mxu0 0.0
        %491 = vmatprep.subr.mxu0 0.0
        %492 = vmatpush2.msra.mxu0 0.0
        %493 = vmatprep.subr.mxu0 0.0
        %494 = vmatpush2.msra.mxu0 0.0
        %495 = vmatprep.subr.mxu0 0.0
        %496 = vmatpush2.msra.mxu0 0.0
        %497 = vmatprep.mubr.f32.mxu0 0.0
        %498 = vmatmul.mubr.f32.gmra.mxu0 %v410
        %v499 = vpop.f32.mrf.mxu0
        %v500 = vadd.f32 %v431, %v499
        %v501 = vpop.f32.mrf.mxu0
        %502 = vdwg.mxu0
        %v503 = vmax.f32 %v500, 0.0
        %504 = vst [vmem:[%s389] sm:$0xff] %v500
        %505 = vst [vmem:[%s396] sm:$0xff] %v503
        %v506 = vld [vmem:[%s353] sm:$0xff]
        %v507 = vld [vmem:[%s353 + $0x8] sm:$0xff]
        %v508 = vld [vmem:[%s353 + $0x10] sm:$0xff]
        %v509 = vld [vmem:[%s353 + $0x18] sm:$0xff]
        %v510 = vld [vmem:[%s353 + $0x20] sm:$0xff]
        %v511 = vld [vmem:[%s353 + $0x28] sm:$0xff]
        %v512 = vld [vmem:[%s353 + $0x30] sm:$0xff]
        %v513 = vld [vmem:[%s353 + $0x38] sm:$0xff]
        %v514 = vld [vmem:[%s353 + $0x40] sm:$0xff]
        %v515 = vld [vmem:[%s353 + $0x48] sm:$0xff]
        %v516 = vld [vmem:[%s353 + $0x50] sm:$0xff]
        %v517 = vld [vmem:[%s353 + $0x58] sm:$0xff]
        %v518 = vld [vmem:[%s353 + $0x60] sm:$0xff]
        %v519 = vld [vmem:[%s353 + $0x68] sm:$0xff]
        %v520 = vld [vmem:[%s353 + $0x70] sm:$0xff]
        %v521 = vld [vmem:[%s353 + $0x78] sm:$0xff]
        %522 = vmatprep.subr.mxu0 0.0
        %523 = vmatpush1.msra.mxu0 %v521
        %524 = vmatprep.subr.mxu0 0.0
        %525 = vmatpush1.msra.mxu0 %v520
        %526 = vmatprep.subr.mxu0 0.0
        %527 = vmatpush1.msra.mxu0 %v519
        %528 = vmatprep.subr.mxu0 0.0
        %529 = vmatpush1.msra.mxu0 %v518
        %530 = vmatprep.subr.mxu0 0.0
        %531 = vmatpush1.msra.mxu0 %v517
        %532 = vmatprep.subr.mxu0 0.0
        %533 = vmatpush1.msra.mxu0 %v516
        %534 = vmatprep.subr.mxu0 0.0
        %535 = vmatpush1.msra.mxu0 %v515
        %536 = vmatprep.subr.mxu0 0.0
        %537 = vmatpush1.msra.mxu0 %v514
        %538 = vmatprep.subr.mxu0 0.0
        %539 = vmatpush1.msra.mxu0 %v513
        %540 = vmatprep.subr.mxu0 0.0
        %541 = vmatpush1.msra.mxu0 %v512
        %542 = vmatprep.subr.mxu0 0.0
        %543 = vmatpush1.msra.mxu0 %v511
        %544 = vmatprep.subr.mxu0 0.0
        %545 = vmatpush1.msra.mxu0 %v510
        %546 = vmatprep.subr.mxu0 0.0
        %547 = vmatpush1.msra.mxu0 %v509
        %548 = vmatprep.subr.mxu0 0.0
        %549 = vmatpush1.msra.mxu0 %v508
        %550 = vmatprep.subr.mxu0 0.0
        %551 = vmatpush1.msra.mxu0 %v507
        %552 = vmatprep.subr.mxu0 0.0
        %553 = vmatpush1.msra.mxu0 %v506
        %554 = vmatprep.subr.mxu0 0.0
        %555 = vmatpush2.msra.mxu0 0.0
        %556 = vmatprep.subr.mxu0 0.0
        %557 = vmatpush2.msra.mxu0 0.0
        %558 = vmatprep.subr.mxu0 0.0
        %559 = vmatpush2.msra.mxu0 0.0
        %560 = vmatprep.subr.mxu0 0.0
        %561 = vmatpush2.msra.mxu0 0.0
        %562 = vmatprep.subr.mxu0 0.0
        %563 = vmatpush2.msra.mxu0 0.0
        %564 = vmatprep.subr.mxu0 0.0
        %565 = vmatpush2.msra.mxu0 0.0
        %566 = vmatprep.subr.mxu0 0.0
        %567 = vmatpush2.msra.mxu0 0.0
        %568 = vmatprep.subr.mxu0 0.0
        %569 = vmatpush2.msra.mxu0 0.0
        %570 = vmatprep.subr.mxu0 0.0
        %571 = vmatpush2.msra.mxu0 0.0
        %572 = vmatprep.subr.mxu0 0.0
        %573 = vmatpush2.msra.mxu0 0.0
        %574 = vmatprep.subr.mxu0 0.0
        %575 = vmatpush2.msra.mxu0 0.0
        %576 = vmatprep.subr.mxu0 0.0
        %577 = vmatpush2.msra.mxu0 0.0
        %578 = vmatprep.subr.mxu0 0.0
        %579 = vmatpush2.msra.mxu0 0.0
        %580 = vmatprep.subr.mxu0 0.0
        %581 = vmatpush2.msra.mxu0 0.0
        %582 = vmatprep.subr.mxu0 0.0
        %583 = vmatpush2.msra.mxu0 0.0
        %584 = vmatprep.subr.mxu0 0.0
        %585 = vmatpush2.msra.mxu0 0.0
        %586 = vmatprep.mubr.f32.mxu0 0.0
        %587 = vmatmul.mubr.f32.gmra.mxu0 %v503
        %v588 = vpop.f32.mrf.mxu0
        %v589 = vadd.f32 0.0, %v588
        %v590 = vpop.f32.mrf.mxu0
        %591 = vdwg.mxu0
        %p592 = scmp.eq.s32.totalorder %s36, 0
        // Predicated region
        $region53: #{tpu_custom_call.1} parent=39 // pred_check
          %p593 = pneg %p592
        $region54: #{tpu_custom_call.1} parent=39 // pred_check_branch
          %595 = sbr.rel (%p593) target = $region56
        $region55: #{tpu_custom_call.1} parent=39 // pred_region
          %596 = vst [vmem:[%s403] sm:$0xff] %v589
        $region56: #{tpu_custom_call.1} parent=39 // pred_fallthru
          _
        %p597 = scmp.gt.s32.totalorder %s36, 0
        // Predicated region
        $region57: #{tpu_custom_call.1} parent=39 // pred_check
          %p598 = pneg %p597
        $region58: #{tpu_custom_call.1} parent=39 // pred_check_branch
          %600 = sbr.rel (%p598) target = $region60
        $region59: #{tpu_custom_call.1} parent=39 // pred_region
          %v601 = vld [vmem:[%s403] sm:$0xff]
          %v602 = vadd.f32 %v601, %v589
          %603 = vst [vmem:[%s403] sm:$0xff] %v602
        $region60: #{tpu_custom_call.1} parent=39 // pred_fallthru
          _
        %p604 = scmp.eq.s32.totalorder %s36, 2
        // Predicated region
        $region61: #{tpu_custom_call.1} parent=39 // pred_check
          %p605 = pneg %p604
        $region62: #{tpu_custom_call.1} parent=39 // pred_check_branch
          %607 = sbr.rel (%p605) target = $region64
        $region63: #{tpu_custom_call.1} parent=39 // pred_region
          %v608 = vld [vmem:[%s403] sm:$0xff]
          %v609 = vld [vmem:[%s4] sm:$0x1]
          %v611 = vlaneseq
          %v612 = vshrl.u32 %v611, 7
          %v613 = vsub.s32 0, %v612
          %v614 = vrot.slane %v609, %v613
          %v616 = vadd.f32 %v608, %v614
          %617 = vst [vmem:[%s403] sm:$0xff] %v616
        $region64: #{tpu_custom_call.1} parent=39 // pred_fallthru
          _
        %s618 = sand.u32 %s173, 1
        %s619 = scalar_lea.sflag [#allocation4], %s618
        %s620 = sand.u32 %s173, 1
        %s621 = smul.addr %s620, 8
        %s622 = scalar_lea.vmem [#allocation8], %s621
        %s623 = sand.u32 %s31, 1
        %s624 = scalar_lea.sflag [#allocation10], %s623
        %s625 = sand.u32 %s201, 1
        %s626 = smul.addr %s625, 8
        %s627 = scalar_lea.vmem [#allocation9], %s626
        %s628 = sand.u32 %s31, 1
        %s629 = scalar_lea.sflag [#allocation10], %s628
        %s630 = sand.u32 %s227, 1
        %s631 = smul.addr %s630, 8
        %s632 = scalar_lea.vmem [#allocation11], %s631
        // Predicated region
        $region65: #{tpu_custom_call.1} parent=39 // pred_check
          %p633 = pneg %p183
        $region66: #{tpu_custom_call.1} parent=39 // pred_check_branch
          %635 = sbr.rel (%p633) target = $region68
        $region67: #{tpu_custom_call.1} parent=39 // pred_region
          %s637 = ssub.s32 128, 128
          %638 = vsyncadd %s619, %s637
          %s639 = smul.addr %s35, 3
          %s640 = sadd.s32 %s36, %s639
          %s641 = smul.addr %s640, 128
          %s642 = scalar_lea.hbm %s5, %s641
          %s644 = sshll.u32 %s622, 4
          %s645 = int_to_ptr.vmem [resolvable:$true] %s644
          %647 = dma.vmem_to_hbm [thread:$0]  %s645, 128, %s642, %s619
        $region68: #{tpu_custom_call.1} parent=39 // pred_fallthru
          _
        // Predicated region
        $region69: #{tpu_custom_call.1} parent=39 // pred_check
          %p648 = pneg %p211
        $region70: #{tpu_custom_call.1} parent=39 // pred_check_branch
          %650 = sbr.rel (%p648) target = $region72
        $region71: #{tpu_custom_call.1} parent=39 // pred_region
          %s652 = ssub.s32 128, 128
          %653 = vsyncadd %s624, %s652
          %s654 = smul.addr %s35, 3
          %s655 = sadd.s32 %s36, %s654
          %s656 = smul.addr %s655, 128
          %s657 = scalar_lea.hbm %s6, %s656
          %s659 = sshll.u32 %s627, 4
          %s660 = int_to_ptr.vmem [resolvable:$true] %s659
          %662 = dma.vmem_to_hbm [thread:$0]  %s660, 128, %s657, %s624
        $region72: #{tpu_custom_call.1} parent=39 // pred_fallthru
          _
        // Predicated region
        $region73: #{tpu_custom_call.1} parent=39 // pred_check
          %p663 = pneg %p237
        $region74: #{tpu_custom_call.1} parent=39 // pred_check_branch
          %665 = sbr.rel (%p663) target = $region76
        $region75: #{tpu_custom_call.1} parent=39 // pred_region
          %s667 = ssub.s32 128, 128
          %668 = vsyncadd %s629, %s667
          %s669 = smul.addr %s35, 128
          %s670 = scalar_lea.hbm %s7, %s669
          %s672 = sshll.u32 %s632, 4
          %s673 = int_to_ptr.vmem [resolvable:$true] %s672
          %675 = dma.vmem_to_hbm [thread:$0]  %s673, 128, %s670, %s629
        $region76: #{tpu_custom_call.1} parent=39 // pred_fallthru
          _
      $region40: #{tpu_custom_call.1} parent=5 // pred_fallthru
        _
      %p676 = scmp.le.s32.totalorder 2, %s26
      // Predicated region
      $region77: #{tpu_custom_call.1} parent=5 // pred_check
        %p677 = pneg %p676
      $region78: #{tpu_custom_call.1} parent=5 // pred_check_branch
        %679 = sbr.rel (%p677) target = $region80
      $region79: #{tpu_custom_call.1} parent=5 // pred_region
        %s680 = ssub.s32 %s26, 2
        // Predicated region
        $region81: #{tpu_custom_call.1} parent=79 // pred_check
          %p681 = pneg %p189
        $region82: #{tpu_custom_call.1} parent=79 // pred_check_branch
          %683 = sbr.rel (%p681) target = $region84
        $region83: #{tpu_custom_call.1} parent=79 // pred_region
          %s684 = sand.u32 %s174, 1
          %s685 = scalar_lea.sflag [#allocation4], %s684
          %s686 = sand.u32 %s174, 1
          %s687 = smul.addr %s686, 8
          %s688 = scalar_lea.vmem [#allocation8], %s687
          %689 = dma.done %s685, 128
        $region84: #{tpu_custom_call.1} parent=79 // pred_fallthru
          _
        // Predicated region
        $region85: #{tpu_custom_call.1} parent=79 // pred_check
          %p690 = pneg %p217
        $region86: #{tpu_custom_call.1} parent=79 // pred_check_branch
          %692 = sbr.rel (%p690) target = $region88
        $region87: #{tpu_custom_call.1} parent=79 // pred_region
          %s693 = sand.u32 %s32, 1
          %s694 = scalar_lea.sflag [#allocation10], %s693
          %s695 = sand.u32 %s202, 1
          %s696 = smul.addr %s695, 8
          %s697 = scalar_lea.vmem [#allocation9], %s696
          %698 = dma.done %s694, 128
        $region88: #{tpu_custom_call.1} parent=79 // pred_fallthru
          _
        // Predicated region
        $region89: #{tpu_custom_call.1} parent=79 // pred_check
          %p699 = pneg %p243
        $region90: #{tpu_custom_call.1} parent=79 // pred_check_branch
          %701 = sbr.rel (%p699) target = $region92
        $region91: #{tpu_custom_call.1} parent=79 // pred_region
          %s702 = sand.u32 %s32, 1
          %s703 = scalar_lea.sflag [#allocation10], %s702
          %s704 = sand.u32 %s228, 1
          %s705 = smul.addr %s704, 8
          %s706 = scalar_lea.vmem [#allocation11], %s705
          %707 = dma.done %s703, 128
        $region92: #{tpu_custom_call.1} parent=79 // pred_fallthru
          _
      $region80: #{tpu_custom_call.1} parent=5 // pred_fallthru
        _
    $region6: #{tpu_custom_call.1} parent=1 // loop_footer
      %s30 = sadd.s32 1, %s26
    $region7: #{tpu_custom_call.1} parent=1 // loop_footer_branch
      %25 = sbr.rel target = $region3
    $region8: #{tpu_custom_call.1} parent=1 // loop_exit
      _
    %708 = vsyncpa [#allocation3], 1
    %s709 = scalar_lea.sflag [#allocation3], 1
    %710 = vsyncpa %s709, 1
    %711 = vsyncpa [#allocation6], 1
    %s712 = scalar_lea.sflag [#allocation6], 1
    %713 = vsyncpa %s712, 1
    %714 = vsyncpa [#allocation4], 1
    %s715 = scalar_lea.sflag [#allocation4], 1
    %716 = vsyncpa %s715, 1
    %717 = vsyncpa [#allocation10], 1
    %s718 = scalar_lea.sflag [#allocation10], 1
    %719 = vsyncpa %s718, 1

</llo_original>
